<compile_context>
chip_gen: v5e
topology: v5e:2x2
jax: 0.10.0
libtpu: 0.0.40
codegen_flags: <defaults>
</compile_context>

<pallas_src>
import jax
import jax.numpy as jnp
from jax.experimental import pallas as pl
from jax.experimental.pallas import tpu as pltpu

LANE = 128  # TPU lane width


def dense_agent_kernel(x_ref, w1_ref, b1_ref, w2_ref, b2_ref, w3_ref, b3_ref,
                       q_ref):
    # x:  (tile_m, F) bf16   w1: (F, D) bf16   b1: (1, D) f32
    # w2: (D, D) bf16        b2: (1, D) f32
    # w3: (D, A_pad) bf16    b3: (1, A_pad) f32
    # q:  (tile_m, A_pad) f32
    x = x_ref[...]

    # fc1 + ReLU: bf16 MXU matmul, f32 accumulate, bias/ReLU in f32.
    h1 = jnp.dot(x, w1_ref[...], preferred_element_type=jnp.float32)
    h1 = jnp.maximum(h1 + b1_ref[...], 0.0)
    h1 = h1.astype(w2_ref.dtype)  # back to bf16 only as MXU input

    # fc2 + ReLU
    h2 = jnp.dot(h1, w2_ref[...], preferred_element_type=jnp.float32)
    h2 = jnp.maximum(h2 + b2_ref[...], 0.0)
    h2 = h2.astype(w3_ref.dtype)

    # fc3 (no activation) — lane-dense (A padded to 128) output store.
    q = jnp.dot(h2, w3_ref[...], preferred_element_type=jnp.float32)
    q = q + b3_ref[...]

    q_ref[...] = q.astype(q_ref.dtype)


def dense_agent_forward(inputs, hidden_state, params, *, batch_tile=128,
                        compute_dtype=jnp.bfloat16):
    """inputs: (B, input_shape) f32. Returns (q (B, n_actions) f32, hidden_state)."""
    w1, b1, w2, b2, w3, b3 = params
    B, F = inputs.shape
    D = w1.shape[1]
    A = w3.shape[1]

    # --- Lane-dense output: zero-pad the action axis up to a multiple of 128.
    A_pad = max(LANE, pl.cdiv(A, LANE) * LANE)
    w3p = jnp.zeros((D, A_pad), w3.dtype).at[:, :A].set(w3)
    b3p = jnp.zeros((1, A_pad), b3.dtype).at[:, :A].set(b3)

    # --- Batch tiling: pad B up to a multiple of the batch tile.
    tile_m = batch_tile
    B_pad = pl.cdiv(B, tile_m) * tile_m
    x = inputs
    if B_pad != B:
        x = jnp.zeros((B_pad, F), inputs.dtype).at[:B].set(inputs)

    # --- bf16 MXU operands; biases stay f32 (bias/ReLU run in f32 in-kernel).
    xc = x.astype(compute_dtype)
    w1c = w1.astype(compute_dtype)
    w2c = w2.astype(compute_dtype)
    w3c = w3p.astype(compute_dtype)
    b1f = b1.astype(jnp.float32)
    b2f = b2.astype(jnp.float32)
    b3f = b3p.astype(jnp.float32)

    grid = (B_pad // tile_m,)

    # Constant index_map -> operand stays resident in VMEM across grid steps.
    resident = lambda a: pl.BlockSpec(a.shape, lambda i: (0, 0))

    nbytes = lambda a: a.size * a.dtype.itemsize
    cost = pl.CostEstimate(
        flops=2 * B_pad * (F * D + D * D + D * A_pad),
        transcendentals=0,
        bytes_accessed=(nbytes(xc) + nbytes(w1c) + nbytes(w2c) + nbytes(w3c)
                        + nbytes(b1f) + nbytes(b2f) + nbytes(b3f)
                        + B_pad * A_pad * 4),
    )

    q = pl.pallas_call(
        dense_agent_kernel,
        out_shape=jax.ShapeDtypeStruct((B_pad, A_pad), jnp.float32),
        grid=grid,
        in_specs=[pl.BlockSpec((tile_m, F), lambda i: (i, 0)),
                  resident(w1c), resident(b1f),
                  resident(w2c), resident(b2f),
                  resident(w3c), resident(b3f)],
        out_specs=pl.BlockSpec((tile_m, A_pad), lambda i: (i, 0)),
        compiler_params=pltpu.CompilerParams(
            dimension_semantics=("parallel",),
            vmem_limit_bytes=64 * 1024 * 1024),
        cost_estimate=cost,
    )(xc, w1c, b1f, w2c, b2f, w3c, b3f)

    # Strip batch padding and the zero-padded action lanes.
    return q[:B, :A], hidden_state


def init_params(key, input_shape, dense_size, n_actions):
    """Deterministic synthetic params. Weights in (in, out) layout, f32."""
    k1, k2, k3, k4, k5, k6 = jax.random.split(key, 6)
    s1 = 1.0 / jnp.sqrt(input_shape)
    s2 = 1.0 / jnp.sqrt(dense_size)
    w1 = jax.random.uniform(k1, (input_shape, dense_size), jnp.float32, -s1, s1)
    b1 = jax.random.uniform(k2, (1, dense_size), jnp.float32, -s1, s1)
    w2 = jax.random.uniform(k3, (dense_size, dense_size), jnp.float32, -s2, s2)
    b2 = jax.random.uniform(k4, (1, dense_size), jnp.float32, -s2, s2)
    w3 = jax.random.uniform(k5, (dense_size, n_actions), jnp.float32, -s2, s2)
    b3 = jax.random.uniform(k6, (1, n_actions), jnp.float32, -s2, s2)
    return (w1, b1, w2, b2, w3, b3)


if __name__ == "__main__":
    # Small shapes consistent with the module:
    #   input_shape=32, args.dense_size=64, args.n_actions=16,
    #   args.rnn_hidden_dim=32 (hidden_state is pass-through only).
    batch = 8
    input_shape = 32
    dense_size = 64
    n_actions = 16
    rnn_hidden_dim = 32

    key = jax.random.PRNGKey(0)
    k_x, k_p = jax.random.split(key)

    x = jax.random.normal(k_x, (batch, input_shape), jnp.float32)
    hidden_state = jnp.zeros((batch, rnn_hidden_dim), jnp.float32)
    params = init_params(k_p, input_shape, dense_size, n_actions)

    q, h_out = dense_agent_forward(x, hidden_state, params)
    q = jax.block_until_ready(q)
    h_out = jax.block_until_ready(h_out)

    # Reference in plain JAX using the same bf16-operand / f32-accumulate math.
    w1, b1, w2, b2, w3, b3 = params
    bf = jnp.bfloat16
    r1 = jnp.maximum(
        jnp.dot(x.astype(bf), w1.astype(bf),
                preferred_element_type=jnp.float32) + b1, 0.0)
    r2 = jnp.maximum(
        jnp.dot(r1.astype(bf), w2.astype(bf),
                preferred_element_type=jnp.float32) + b2, 0.0)
    q_ref = jnp.dot(r2.astype(bf), w3.astype(bf),
                    preferred_element_type=jnp.float32) + b3

    assert q.shape == (batch, n_actions)
    assert jnp.allclose(q, q_ref, atol=1e-3, rtol=1e-3)
    assert jnp.array_equal(h_out, hidden_state)

    print("KERNEL_OK")
</pallas_src>

<mosaic_0001>
module attributes {stable_mosaic.version = 11 : i64} {
  func.func @dense_agent_kernel(%arg0: i32, %arg1: memref<128x32xbf16, #tpu.memory_space<vmem>>, %arg2: memref<32x64xbf16, #tpu.memory_space<vmem>>, %arg3: memref<1x64xf32, #tpu.memory_space<vmem>>, %arg4: memref<64x64xbf16, #tpu.memory_space<vmem>>, %arg5: memref<1x64xf32, #tpu.memory_space<vmem>>, %arg6: memref<64x128xbf16, #tpu.memory_space<vmem>>, %arg7: memref<1x128xf32, #tpu.memory_space<vmem>>, %arg8: memref<128x128xf32, #tpu.memory_space<vmem>>) attributes {dimension_semantics = [#tpu.dimension_semantics<parallel>], iteration_bounds = array<i64: 1>, scalar_prefetch = 0 : i64, scratch_operands = 0 : i64, tpu.core_type = #tpu.core_type<tc>, window_params = [{transform_indices = @transform_0, window_bounds = array<i64: 128, 32>}, {pipeline_mode = #tpu.pipeline_mode<synchronous>, transform_indices = @transform_1, window_bounds = array<i64: 32, 64>}, {pipeline_mode = #tpu.pipeline_mode<synchronous>, transform_indices = @transform_2, window_bounds = array<i64: 1, 64>}, {pipeline_mode = #tpu.pipeline_mode<synchronous>, transform_indices = @transform_3, window_bounds = array<i64: 64, 64>}, {pipeline_mode = #tpu.pipeline_mode<synchronous>, transform_indices = @transform_4, window_bounds = array<i64: 1, 64>}, {pipeline_mode = #tpu.pipeline_mode<synchronous>, transform_indices = @transform_5, window_bounds = array<i64: 64, 128>}, {pipeline_mode = #tpu.pipeline_mode<synchronous>, transform_indices = @transform_6, window_bounds = array<i64: 1, 128>}, {transform_indices = @transform_7, window_bounds = array<i64: 128, 128>}]} {
    %c0 = arith.constant 0 : index
    %c0_0 = arith.constant 0 : index
    %0 = vector.load %arg1[%c0, %c0_0] : memref<128x32xbf16, #tpu.memory_space<vmem>>, vector<128x32xbf16>
    %c0_1 = arith.constant 0 : index
    %c0_2 = arith.constant 0 : index
    %1 = vector.load %arg2[%c0_1, %c0_2] : memref<32x64xbf16, #tpu.memory_space<vmem>>, vector<32x64xbf16>
    %cst = arith.constant dense<0.000000e+00> : vector<128x64xf32>
    %2 = tpu.matmul %0, %1, %cst {dimension_numbers = #tpu.dot_dimension_numbers<[1], [0], [0], [1], [0, 0, 1, 1], [], []>} : vector<128x32xbf16>, vector<32x64xbf16>, vector<128x64xf32> -> vector<128x64xf32>
    %c0_3 = arith.constant 0 : index
    %c0_4 = arith.constant 0 : index
    %3 = vector.load %arg3[%c0_3, %c0_4] : memref<1x64xf32, #tpu.memory_space<vmem>>, vector<1x64xf32>
    %4 = vector.broadcast %3 : vector<1x64xf32> to vector<128x64xf32>
    %5 = arith.addf %2, %4 : vector<128x64xf32>
    %cst_5 = arith.constant 0.000000e+00 : f32
    %6 = vector.broadcast %cst_5 : f32 to vector<128x64xf32>
    %7 = arith.maximumf %5, %6 : vector<128x64xf32>
    %8 = arith.truncf %7 : vector<128x64xf32> to vector<128x64xbf16>
    %c0_6 = arith.constant 0 : index
    %c0_7 = arith.constant 0 : index
    %9 = vector.load %arg4[%c0_6, %c0_7] : memref<64x64xbf16, #tpu.memory_space<vmem>>, vector<64x64xbf16>
    %cst_8 = arith.constant dense<0.000000e+00> : vector<128x64xf32>
    %10 = tpu.matmul %8, %9, %cst_8 {dimension_numbers = #tpu.dot_dimension_numbers<[1], [0], [0], [1], [0, 0, 1, 1], [], []>} : vector<128x64xbf16>, vector<64x64xbf16>, vector<128x64xf32> -> vector<128x64xf32>
    %c0_9 = arith.constant 0 : index
    %c0_10 = arith.constant 0 : index
    %11 = vector.load %arg5[%c0_9, %c0_10] : memref<1x64xf32, #tpu.memory_space<vmem>>, vector<1x64xf32>
    %12 = vector.broadcast %11 : vector<1x64xf32> to vector<128x64xf32>
    %13 = arith.addf %10, %12 : vector<128x64xf32>
    %cst_11 = arith.constant 0.000000e+00 : f32
    %14 = vector.broadcast %cst_11 : f32 to vector<128x64xf32>
    %15 = arith.maximumf %13, %14 : vector<128x64xf32>
    %16 = arith.truncf %15 : vector<128x64xf32> to vector<128x64xbf16>
    %c0_12 = arith.constant 0 : index
    %c0_13 = arith.constant 0 : index
    %17 = vector.load %arg6[%c0_12, %c0_13] : memref<64x128xbf16, #tpu.memory_space<vmem>>, vector<64x128xbf16>
    %cst_14 = arith.constant dense<0.000000e+00> : vector<128x128xf32>
    %18 = tpu.matmul %16, %17, %cst_14 {dimension_numbers = #tpu.dot_dimension_numbers<[1], [0], [0], [1], [0, 0, 1, 1], [], []>} : vector<128x64xbf16>, vector<64x128xbf16>, vector<128x128xf32> -> vector<128x128xf32>
    %c0_15 = arith.constant 0 : index
    %c0_16 = arith.constant 0 : index
    %19 = vector.load %arg7[%c0_15, %c0_16] : memref<1x128xf32, #tpu.memory_space<vmem>>, vector<1x128xf32>
    %20 = vector.broadcast %19 : vector<1x128xf32> to vector<128x128xf32>
    %21 = arith.addf %18, %20 : vector<128x128xf32>
    %c0_17 = arith.constant 0 : index
    %c0_18 = arith.constant 0 : index
    %22 = vector.load %arg8[%c0_17, %c0_18] : memref<128x128xf32, #tpu.memory_space<vmem>>, vector<128x128xf32>
    tpu.vector_store %arg8[%c0_17, %c0_18], %21 {strides = array<i32>} : memref<128x128xf32, #tpu.memory_space<vmem>>, vector<128x128xf32>,
    return
  }
  func.func @transform_0(%arg0: i32) -> (i32, i32) {
    %c0_i32 = arith.constant 0 : i32
    %c0_i32_0 = arith.constant 0 : i32
    return %arg0, %c0_i32 : i32, i32
  }
  func.func @transform_1(%arg0: i32) -> (i32, i32) {
    %c0_i32 = arith.constant 0 : i32
    %c0_i32_0 = arith.constant 0 : i32
    %c0_i32_1 = arith.constant 0 : i32
    return %c0_i32, %c0_i32_0 : i32, i32
  }
  func.func @transform_2(%arg0: i32) -> (i32, i32) {
    %c0_i32 = arith.constant 0 : i32
    %c0_i32_0 = arith.constant 0 : i32
    %c0_i32_1 = arith.constant 0 : i32
    return %c0_i32, %c0_i32_0 : i32, i32
  }
  func.func @transform_3(%arg0: i32) -> (i32, i32) {
    %c0_i32 = arith.constant 0 : i32
    %c0_i32_0 = arith.constant 0 : i32
    %c0_i32_1 = arith.constant 0 : i32
    return %c0_i32, %c0_i32_0 : i32, i32
  }
  func.func @transform_4(%arg0: i32) -> (i32, i32) {
    %c0_i32 = arith.constant 0 : i32
    %c0_i32_0 = arith.constant 0 : i32
    %c0_i32_1 = arith.constant 0 : i32
    return %c0_i32, %c0_i32_0 : i32, i32
  }
  func.func @transform_5(%arg0: i32) -> (i32, i32) {
    %c0_i32 = arith.constant 0 : i32
    %c0_i32_0 = arith.constant 0 : i32
    %c0_i32_1 = arith.constant 0 : i32
    return %c0_i32, %c0_i32_0 : i32, i32
  }
  func.func @transform_6(%arg0: i32) -> (i32, i32) {
    %c0_i32 = arith.constant 0 : i32
    %c0_i32_0 = arith.constant 0 : i32
    %c0_i32_1 = arith.constant 0 : i32
    return %c0_i32, %c0_i32_0 : i32, i32
  }
  func.func @transform_7(%arg0: i32) -> (i32, i32) {
    %c0_i32 = arith.constant 0 : i32
    %c0_i32_0 = arith.constant 0 : i32
    return %arg0, %c0_i32 : i32, i32
  }
}

</mosaic_0001>

<llo_original>
// kernel: tpu_custom_call.1
$region0: #{tpu_custom_call.1}
  #allocation0 [shape = 'u32[]', space=smem, size = 0x4, offset = 0x4, fixed_abs, tag = 'smem constant byte address 0x4 - core index']
  #allocation1 [shape = 'u32[72,128]{1,0:T(1,128)}', space=vmem, size = 0x9000, scoped, tag = 'internal scratch']
  %s0 = inlined_call_operand.vmem [shape: bf16[128,32], index: 0, kind: input, shape index: {}]
  %s1 = inlined_call_operand.vmem [shape: bf16[32,64], index: 1, kind: input, shape index: {}]
  %s2 = inlined_call_operand.vmem [shape: f32[1,64], index: 2, kind: input, shape index: {}]
  %s3 = inlined_call_operand.vmem [shape: bf16[64,64], index: 3, kind: input, shape index: {}]
  %s4 = inlined_call_operand.vmem [shape: f32[1,64], index: 4, kind: input, shape index: {}]
  %s5 = inlined_call_operand.vmem [shape: bf16[64,128], index: 5, kind: input, shape index: {}]
  %s6 = inlined_call_operand.vmem [shape: f32[1,128], index: 6, kind: input, shape index: {}]
  %s7 = inlined_call_operand.hbm [shape: f32[128,128], index: 7, kind: output, shape index: {}]
  %s8 = sld [smem:[#allocation0]]
  $region38: #{tpu_custom_call.1} parent=0
    _
  %s10 = ssub.s32 1, %s8
  %s11 = scalar_select 0, %s10, %s8
  $region1: #{tpu_custom_call.1} parent=0
    #allocation2 [shape = 'u8[65536]{0}', space=vmem, size = 0x10000, scoped, tag = 'output window, operand 0, single buffered']
    #allocation3 [shape = 's32[1]{0}', space=sflag, size = 0x4, scoped, tag = 'scoped memory for tpu_custom_call.1']
    %12 = vsyncpa [#allocation3], 0
    // Predicated region
    $region2: #{tpu_custom_call.1} parent=1 // pred_check
      _
    $region3: #{tpu_custom_call.1} parent=1 // pred_check_branch
      %14 = sbr.rel (0) target = $region5
    $region4: #{tpu_custom_call.1} parent=1 // pred_region
      _
    $region5: #{tpu_custom_call.1} parent=1 // pred_fallthru
      _
    // Predicated region
    $region6: #{tpu_custom_call.1} parent=1 // pred_check
      _
    $region7: #{tpu_custom_call.1} parent=1 // pred_check_branch
      %16 = sbr.rel (0) target = $region9
    $region8: #{tpu_custom_call.1} parent=1 // pred_region
      _
    $region9: #{tpu_custom_call.1} parent=1 // pred_fallthru
      _
    // Predicated region
    $region10: #{tpu_custom_call.1} parent=1 // pred_check
      _
    $region11: #{tpu_custom_call.1} parent=1 // pred_check_branch
      %18 = sbr.rel (0) target = $region13
    $region12: #{tpu_custom_call.1} parent=1 // pred_region
      _
    $region13: #{tpu_custom_call.1} parent=1 // pred_fallthru
      _
    // Predicated region
    $region14: #{tpu_custom_call.1} parent=1 // pred_check
      _
    $region15: #{tpu_custom_call.1} parent=1 // pred_check_branch
      %20 = sbr.rel (0) target = $region17
    $region16: #{tpu_custom_call.1} parent=1 // pred_region
      _
    $region17: #{tpu_custom_call.1} parent=1 // pred_fallthru
      _
    // Predicated region
    $region18: #{tpu_custom_call.1} parent=1 // pred_check
      _
    $region19: #{tpu_custom_call.1} parent=1 // pred_check_branch
      %22 = sbr.rel (0) target = $region21
    $region20: #{tpu_custom_call.1} parent=1 // pred_region
      _
    $region21: #{tpu_custom_call.1} parent=1 // pred_fallthru
      _
    // Predicated region
    $region22: #{tpu_custom_call.1} parent=1 // pred_check
      _
    $region23: #{tpu_custom_call.1} parent=1 // pred_check_branch
      %24 = sbr.rel (0) target = $region25
    $region24: #{tpu_custom_call.1} parent=1 // pred_region
      _
    $region25: #{tpu_custom_call.1} parent=1 // pred_fallthru
      _
    // Predicated region
    $region26: #{tpu_custom_call.1} parent=1 // pred_check
      _
    $region27: #{tpu_custom_call.1} parent=1 // pred_check_branch
      %26 = sbr.rel (0) target = $region29
    $region28: #{tpu_custom_call.1} parent=1 // pred_region
      _
    $region29: #{tpu_custom_call.1} parent=1 // pred_fallthru
      _
    %v28 = vld [vmem:[%s0] sm:$0xf]
    %v29 = vld [vmem:[%s0 + $0x4] sm:$0xf]
    %v30 = vld [vmem:[%s0 + $0x8] sm:$0xf]
    %v31 = vld [vmem:[%s0 + $0xc] sm:$0xf]
    %v32 = vld [vmem:[%s0 + $0x10] sm:$0xf]
    %v33 = vld [vmem:[%s0 + $0x14] sm:$0xf]
    %v34 = vld [vmem:[%s0 + $0x18] sm:$0xf]
    %v35 = vld [vmem:[%s0 + $0x1c] sm:$0xf]
    %v36 = vld [vmem:[%s0 + $0x20] sm:$0xf]
    %v37 = vld [vmem:[%s0 + $0x24] sm:$0xf]
    %v38 = vld [vmem:[%s0 + $0x28] sm:$0xf]
    %v39 = vld [vmem:[%s0 + $0x2c] sm:$0xf]
    %v40 = vld [vmem:[%s0 + $0x30] sm:$0xf]
    %v41 = vld [vmem:[%s0 + $0x34] sm:$0xf]
    %v42 = vld [vmem:[%s0 + $0x38] sm:$0xf]
    %v43 = vld [vmem:[%s0 + $0x3c] sm:$0xf]
    %v44 = vld [vmem:[%s1] sm:$0xf]
    %v45 = vld [vmem:[%s1 + $0x4] sm:$0xf]
    %v46 = vld [vmem:[%s1 + $0x8] sm:$0xf]
    %v47 = vld [vmem:[%s1 + $0xc] sm:$0xf]
    %v48 = vld [vmem:[%s2] sm:$0x1]
    %v50 = vperm.slane %v48, 0
    %v68 = vunpack.c.l.b16 %v28
    %v69 = vunpack.c.l.b16 %v29
    %v70 = vunpack.c.l.b16 %v30
    %v71 = vunpack.c.l.b16 %v31
    %v72 = vunpack.c.l.b16 %v32
    %v73 = vunpack.c.l.b16 %v33
    %v74 = vunpack.c.l.b16 %v34
    %v75 = vunpack.c.l.b16 %v35
    %v76 = vunpack.c.l.b16 %v36
    %v77 = vunpack.c.l.b16 %v37
    %v78 = vunpack.c.l.b16 %v38
    %v79 = vunpack.c.l.b16 %v39
    %v80 = vunpack.c.l.b16 %v40
    %v81 = vunpack.c.l.b16 %v41
    %v82 = vunpack.c.l.b16 %v42
    %v83 = vunpack.c.l.b16 %v43
    %v84 = vpack.c.b16 %v69, %v68
    %v85 = vpack.c.b16 %v71, %v70
    %v86 = vpack.c.b16 %v73, %v72
    %v87 = vpack.c.b16 %v75, %v74
    %v88 = vpack.c.b16 %v77, %v76
    %v89 = vpack.c.b16 %v79, %v78
    %v90 = vpack.c.b16 %v81, %v80
    %v91 = vpack.c.b16 %v83, %v82
    %v96 = vunpack.c.l.b16 %v44
    %v97 = vunpack.c.l.b16 %v45
    %v98 = vunpack.c.l.b16 %v46
    %v99 = vunpack.c.l.b16 %v47
    %v100 = vpack.c.b16 %v97, %v96
    %v101 = vpack.c.b16 %v99, %v98
    %vm104 = vcmask 261120
    %v106 = vsel %vm104, %v84, 0
    %v109 = vsel %vm104, %v85, 0
    %v112 = vsel %vm104, %v86, 0
    %v115 = vsel %vm104, %v87, 0
    %v118 = vsel %vm104, %v88, 0
    %v121 = vsel %vm104, %v89, 0
    %v124 = vsel %vm104, %v90, 0
    %v127 = vsel %vm104, %v91, 0
    %129 = vmatpush.bf16.msra.mxu0 0
    %130 = vmatpush.bf16.msra.mxu0 0
    %131 = vmatpush.bf16.msra.mxu0 0
    %132 = vmatpush.bf16.msra.mxu0 0
    %133 = vmatpush.bf16.msra.mxu0 0
    %134 = vmatpush.bf16.msra.mxu0 0
    %135 = vmatpush.bf16.msra.mxu0 %v101
    %136 = vmatpush.bf16.msra.mxu0 %v100
    %137 = vmatmul.bf16.gmra.mxu0 %v106
    %v138 = vpop.f32.mrf.mxu0
    %v139 = vadd.f32 %v50, %v138
    %v140 = vpop.f32.mrf.mxu0
    %v141 = vadd.f32 %v50, %v140
    %142 = vmatmul.bf16.gmra.mxu0 %v109
    %v143 = vpop.f32.mrf.mxu0
    %v144 = vadd.f32 %v50, %v143
    %v145 = vpop.f32.mrf.mxu0
    %v146 = vadd.f32 %v50, %v145
    %147 = vmatmul.bf16.gmra.mxu0 %v112
    %v148 = vpop.f32.mrf.mxu0
    %v149 = vadd.f32 %v50, %v148
    %v150 = vpop.f32.mrf.mxu0
    %v151 = vadd.f32 %v50, %v150
    %152 = vmatmul.bf16.gmra.mxu0 %v115
    %v153 = vpop.f32.mrf.mxu0
    %v154 = vadd.f32 %v50, %v153
    %v155 = vpop.f32.mrf.mxu0
    %v156 = vadd.f32 %v50, %v155
    %157 = vmatmul.bf16.gmra.mxu0 %v118
    %v158 = vpop.f32.mrf.mxu0
    %v159 = vadd.f32 %v50, %v158
    %v160 = vpop.f32.mrf.mxu0
    %v161 = vadd.f32 %v50, %v160
    %162 = vmatmul.bf16.gmra.mxu0 %v121
    %v163 = vpop.f32.mrf.mxu0
    %v164 = vadd.f32 %v50, %v163
    %v165 = vpop.f32.mrf.mxu0
    %v166 = vadd.f32 %v50, %v165
    %167 = vmatmul.bf16.gmra.mxu0 %v124
    %v168 = vpop.f32.mrf.mxu0
    %v169 = vadd.f32 %v50, %v168
    %v170 = vpop.f32.mrf.mxu0
    %v171 = vadd.f32 %v50, %v170
    %172 = vmatmul.bf16.gmra.mxu0 %v127
    %v173 = vpop.f32.mrf.mxu0
    %v174 = vadd.f32 %v50, %v173
    %v175 = vpop.f32.mrf.mxu0
    %v176 = vadd.f32 %v50, %v175
    %177 = vdwg.mxu0
    %v178 = vmax.f32 %v139, 0.0
    %v179 = vmax.f32 %v141, 0.0
    %v180 = vmax.f32 %v144, 0.0
    %v181 = vmax.f32 %v146, 0.0
    %v182 = vmax.f32 %v149, 0.0
    %v183 = vmax.f32 %v151, 0.0
    %v184 = vmax.f32 %v154, 0.0
    %v185 = vmax.f32 %v156, 0.0
    %v186 = vmax.f32 %v159, 0.0
    %v187 = vmax.f32 %v161, 0.0
    %v188 = vmax.f32 %v164, 0.0
    %v189 = vmax.f32 %v166, 0.0
    %v190 = vmax.f32 %v169, 0.0
    %v191 = vmax.f32 %v171, 0.0
    %v192 = vmax.f32 %v174, 0.0
    %v193 = vmax.f32 %v176, 0.0
    %v194 = vpack.c.bf16 %v179, %v178
    %v195 = vpack.c.bf16 %v181, %v180
    %v196 = vpack.c.bf16 %v183, %v182
    %v197 = vpack.c.bf16 %v185, %v184
    %v198 = vpack.c.bf16 %v187, %v186
    %v199 = vpack.c.bf16 %v189, %v188
    %v200 = vpack.c.bf16 %v191, %v190
    %v201 = vpack.c.bf16 %v193, %v192
    %v202 = vld [vmem:[%s3] sm:$0xf]
    %v203 = vld [vmem:[%s3 + $0x4] sm:$0xf]
    %v204 = vld [vmem:[%s3 + $0x8] sm:$0xf]
    %v205 = vld [vmem:[%s3 + $0xc] sm:$0xf]
    %v206 = vld [vmem:[%s3 + $0x10] sm:$0xf]
    %v207 = vld [vmem:[%s3 + $0x14] sm:$0xf]
    %v208 = vld [vmem:[%s3 + $0x18] sm:$0xf]
    %v209 = vld [vmem:[%s3 + $0x1c] sm:$0xf]
    %v210 = vld [vmem:[%s4] sm:$0x1]
    %v212 = vperm.slane %v210, 0
    %v222 = vunpack.c.l.b16 %v202
    %v223 = vunpack.c.l.b16 %v203
    %v224 = vunpack.c.l.b16 %v204
    %v225 = vunpack.c.l.b16 %v205
    %v226 = vunpack.c.l.b16 %v206
    %v227 = vunpack.c.l.b16 %v207
    %v228 = vunpack.c.l.b16 %v208
    %v229 = vunpack.c.l.b16 %v209
    %v230 = vpack.c.b16 %v223, %v222
    %v231 = vpack.c.b16 %v225, %v224
    %v232 = vpack.c.b16 %v227, %v226
    %v233 = vpack.c.b16 %v229, %v228
    %vm238 = vcmask 523264
    %v240 = vsel %vm238, %v194, 0
    %v243 = vsel %vm238, %v195, 0
    %v246 = vsel %vm238, %v196, 0
    %v249 = vsel %vm238, %v197, 0
    %v252 = vsel %vm238, %v198, 0
    %v255 = vsel %vm238, %v199, 0
    %v258 = vsel %vm238, %v200, 0
    %v261 = vsel %vm238, %v201, 0
    %263 = vmatpush.bf16.msra.mxu0 0
    %264 = vmatpush.bf16.msra.mxu0 0
    %265 = vmatpush.bf16.msra.mxu0 0
    %266 = vmatpush.bf16.msra.mxu0 0
    %267 = vmatpush.bf16.msra.mxu0 %v233
    %268 = vmatpush.bf16.msra.mxu0 %v232
    %269 = vmatpush.bf16.msra.mxu0 %v231
    %270 = vmatpush.bf16.msra.mxu0 %v230
    %271 = vmatmul.bf16.gmra.mxu0 %v240
    %v272 = vpop.f32.mrf.mxu0
    %v273 = vadd.f32 %v212, %v272
    %v274 = vpop.f32.mrf.mxu0
    %v275 = vadd.f32 %v212, %v274
    %276 = vmatmul.bf16.gmra.mxu0 %v243
    %v277 = vpop.f32.mrf.mxu0
    %v278 = vadd.f32 %v212, %v277
    %v279 = vpop.f32.mrf.mxu0
    %v280 = vadd.f32 %v212, %v279
    %281 = vmatmul.bf16.gmra.mxu0 %v246
    %v282 = vpop.f32.mrf.mxu0
    %v283 = vadd.f32 %v212, %v282
    %v284 = vpop.f32.mrf.mxu0
    %v285 = vadd.f32 %v212, %v284
    %286 = vmatmul.bf16.gmra.mxu0 %v249
    %v287 = vpop.f32.mrf.mxu0
    %v288 = vadd.f32 %v212, %v287
    %v289 = vpop.f32.mrf.mxu0
    %v290 = vadd.f32 %v212, %v289
    %291 = vmatmul.bf16.gmra.mxu0 %v252
    %v292 = vpop.f32.mrf.mxu0
    %v293 = vadd.f32 %v212, %v292
    %v294 = vpop.f32.mrf.mxu0
    %v295 = vadd.f32 %v212, %v294
    %296 = vmatmul.bf16.gmra.mxu0 %v255
    %v297 = vpop.f32.mrf.mxu0
    %v298 = vadd.f32 %v212, %v297
    %v299 = vpop.f32.mrf.mxu0
    %v300 = vadd.f32 %v212, %v299
    %301 = vmatmul.bf16.gmra.mxu0 %v258
    %v302 = vpop.f32.mrf.mxu0
    %v303 = vadd.f32 %v212, %v302
    %v304 = vpop.f32.mrf.mxu0
    %v305 = vadd.f32 %v212, %v304
    %306 = vmatmul.bf16.gmra.mxu0 %v261
    %v307 = vpop.f32.mrf.mxu0
    %v308 = vadd.f32 %v212, %v307
    %v309 = vpop.f32.mrf.mxu0
    %v310 = vadd.f32 %v212, %v309
    %311 = vdwg.mxu0
    %v312 = vmax.f32 %v273, 0.0
    %v313 = vmax.f32 %v275, 0.0
    %v314 = vmax.f32 %v278, 0.0
    %v315 = vmax.f32 %v280, 0.0
    %v316 = vmax.f32 %v283, 0.0
    %v317 = vmax.f32 %v285, 0.0
    %v318 = vmax.f32 %v288, 0.0
    %v319 = vmax.f32 %v290, 0.0
    %v320 = vmax.f32 %v293, 0.0
    %v321 = vmax.f32 %v295, 0.0
    %v322 = vmax.f32 %v298, 0.0
    %v323 = vmax.f32 %v300, 0.0
    %v324 = vmax.f32 %v303, 0.0
    %v325 = vmax.f32 %v305, 0.0
    %v326 = vmax.f32 %v308, 0.0
    %v327 = vmax.f32 %v310, 0.0
    %v328 = vpack.c.bf16 %v313, %v312
    %v329 = vpack.c.bf16 %v315, %v314
    %v330 = vpack.c.bf16 %v317, %v316
    %v331 = vpack.c.bf16 %v319, %v318
    %v332 = vpack.c.bf16 %v321, %v320
    %v333 = vpack.c.bf16 %v323, %v322
    %v334 = vpack.c.bf16 %v325, %v324
    %v335 = vpack.c.bf16 %v327, %v326
    %v336 = vld [vmem:[%s5] sm:$0xf]
    %v337 = vld [vmem:[%s5 + $0x4] sm:$0xf]
    %v338 = vld [vmem:[%s5 + $0x8] sm:$0xf]
    %v339 = vld [vmem:[%s5 + $0xc] sm:$0xf]
    %v340 = vld [vmem:[%s5 + $0x10] sm:$0xf]
    %v341 = vld [vmem:[%s5 + $0x14] sm:$0xf]
    %v342 = vld [vmem:[%s5 + $0x18] sm:$0xf]
    %v343 = vld [vmem:[%s5 + $0x1c] sm:$0xf]
    %v344 = vld [vmem:[%s6] sm:$0x1]
    %v346 = vperm.slane %v344, 0
    %v356 = vunpack.c.l.b16 %v336
    %v357 = vunpack.c.l.b16 %v337
    %v358 = vunpack.c.l.b16 %v338
    %v359 = vunpack.c.l.b16 %v339
    %v360 = vunpack.c.l.b16 %v340
    %v361 = vunpack.c.l.b16 %v341
    %v362 = vunpack.c.l.b16 %v342
    %v363 = vunpack.c.l.b16 %v343
    %v364 = vpack.c.b16 %v357, %v356
    %v365 = vpack.c.b16 %v359, %v358
    %v366 = vpack.c.b16 %v361, %v360
    %v367 = vpack.c.b16 %v363, %v362
    %v373 = vsel %vm238, %v328, 0
    %v376 = vsel %vm238, %v329, 0
    %v379 = vsel %vm238, %v330, 0
    %v382 = vsel %vm238, %v331, 0
    %v385 = vsel %vm238, %v332, 0
    %v388 = vsel %vm238, %v333, 0
    %v391 = vsel %vm238, %v334, 0
    %v394 = vsel %vm238, %v335, 0
    %396 = vmatpush.bf16.msra.mxu0 0
    %397 = vmatpush.bf16.msra.mxu0 0
    %398 = vmatpush.bf16.msra.mxu0 0
    %399 = vmatpush.bf16.msra.mxu0 0
    %400 = vmatpush.bf16.msra.mxu0 %v367
    %401 = vmatpush.bf16.msra.mxu0 %v366
    %402 = vmatpush.bf16.msra.mxu0 %v365
    %403 = vmatpush.bf16.msra.mxu0 %v364
    %404 = vmatmul.bf16.gmra.mxu0 %v373
    %v405 = vpop.f32.mrf.mxu0
    %v406 = vadd.f32 %v346, %v405
    %v407 = vpop.f32.mrf.mxu0
    %v408 = vadd.f32 %v346, %v407
    %409 = vmatmul.bf16.gmra.mxu0 %v376
    %v410 = vpop.f32.mrf.mxu0
    %v411 = vadd.f32 %v346, %v410
    %v412 = vpop.f32.mrf.mxu0
    %v413 = vadd.f32 %v346, %v412
    %414 = vmatmul.bf16.gmra.mxu0 %v379
    %v415 = vpop.f32.mrf.mxu0
    %v416 = vadd.f32 %v346, %v415
    %v417 = vpop.f32.mrf.mxu0
    %v418 = vadd.f32 %v346, %v417
    %419 = vmatmul.bf16.gmra.mxu0 %v382
    %v420 = vpop.f32.mrf.mxu0
    %v421 = vadd.f32 %v346, %v420
    %v422 = vpop.f32.mrf.mxu0
    %v423 = vadd.f32 %v346, %v422
    %424 = vmatmul.bf16.gmra.mxu0 %v385
    %v425 = vpop.f32.mrf.mxu0
    %v426 = vadd.f32 %v346, %v425
    %v427 = vpop.f32.mrf.mxu0
    %v428 = vadd.f32 %v346, %v427
    %429 = vmatmul.bf16.gmra.mxu0 %v388
    %v430 = vpop.f32.mrf.mxu0
    %v431 = vadd.f32 %v346, %v430
    %v432 = vpop.f32.mrf.mxu0
    %v433 = vadd.f32 %v346, %v432
    %434 = vmatmul.bf16.gmra.mxu0 %v391
    %v435 = vpop.f32.mrf.mxu0
    %v436 = vadd.f32 %v346, %v435
    %v437 = vpop.f32.mrf.mxu0
    %v438 = vadd.f32 %v346, %v437
    %439 = vmatmul.bf16.gmra.mxu0 %v394
    %v440 = vpop.f32.mrf.mxu0
    %v441 = vadd.f32 %v346, %v440
    %v442 = vpop.f32.mrf.mxu0
    %v443 = vadd.f32 %v346, %v442
    %444 = vdwg.mxu0
    %445 = vst [vmem:[#allocation2] sm:$0xff] %v406
    %446 = vst [vmem:[#allocation2 + $0x8] sm:$0xff] %v408
    %447 = vst [vmem:[#allocation2 + $0x10] sm:$0xff] %v411
    %448 = vst [vmem:[#allocation2 + $0x18] sm:$0xff] %v413
    %449 = vst [vmem:[#allocation2 + $0x20] sm:$0xff] %v416
    %450 = vst [vmem:[#allocation2 + $0x28] sm:$0xff] %v418
    %451 = vst [vmem:[#allocation2 + $0x30] sm:$0xff] %v421
    %452 = vst [vmem:[#allocation2 + $0x38] sm:$0xff] %v423
    %453 = vst [vmem:[#allocation2 + $0x40] sm:$0xff] %v426
    %454 = vst [vmem:[#allocation2 + $0x48] sm:$0xff] %v428
    %455 = vst [vmem:[#allocation2 + $0x50] sm:$0xff] %v431
    %456 = vst [vmem:[#allocation2 + $0x58] sm:$0xff] %v433
    %457 = vst [vmem:[#allocation2 + $0x60] sm:$0xff] %v436
    %458 = vst [vmem:[#allocation2 + $0x68] sm:$0xff] %v438
    %459 = vst [vmem:[#allocation2 + $0x70] sm:$0xff] %v441
    %460 = vst [vmem:[#allocation2 + $0x78] sm:$0xff] %v443
    // Predicated region
    $region30: #{tpu_custom_call.1} parent=1 // pred_check
      _
    $region31: #{tpu_custom_call.1} parent=1 // pred_check_branch
      %462 = sbr.rel (0) target = $region33
    $region32: #{tpu_custom_call.1} parent=1 // pred_region
      %464 = vsyncadd [#allocation3], 0
      %s465 = sshll.u32 [#allocation2], 4
      %s466 = int_to_ptr.vmem [resolvable:$true] %s465
      %s467 = sshll.u32 %s7, 4
      %s468 = int_to_ptr.hbm [resolvable:$true] %s467
      %473 = dma.vmem_to_hbm [thread:$0]  %s466, 2048, %s468, [#allocation3], 128, 128, 8
    $region33: #{tpu_custom_call.1} parent=1 // pred_fallthru
      _
    // Predicated region
    $region34: #{tpu_custom_call.1} parent=1 // pred_check
      _
    $region35: #{tpu_custom_call.1} parent=1 // pred_check_branch
      %475 = sbr.rel (0) target = $region37
    $region36: #{tpu_custom_call.1} parent=1 // pred_region
      %477 = dma.done [#allocation3], 2048
    $region37: #{tpu_custom_call.1} parent=1 // pred_fallthru
      _
    %478 = vsyncpa [#allocation3], 1

</llo_original>
